<compile_context>
chip_gen: v5e
topology: v5e:2x2
jax: 0.10.0
libtpu: 0.0.40
codegen_flags: <defaults>
</compile_context>

<pallas_src>
import math

import jax
import jax.numpy as jnp
from jax.experimental import pallas as pl
from jax.experimental.pallas import tpu as pltpu

B, N, F, GH, H = 2, 16, 4, 128, 32  # batch, nodes, features, gcn hidden, lstm hidden


# ----------------------- fused GCN + 2-layer LSTM kernel --------------------
# Per batch element b (B=2, unrolled python loop):
#   h_b  = relu(A @ (x_b @ W1) + b1)                   (N, GH)   -- MXU
#   z_b  = relu((A @ h_b) @ w2 + b2)                   (N, 1)    -- MXU + VPU lane-reduce
#            (== A @ (h_b @ w2), reassociated to avoid a width-1 MXU pass)
#   pregate_b = z_b^T @ Wih1                           (1, 4H)   -- VPU sublane-reduce
# followed by a single step of a 2-layer LSTM (PyTorch gate order i,f,g,o)
# with zero initial state (hidden=None semantics).
def encoder_kernel(x_ref, a_ref, w1_ref, b1_ref, w2r_ref, b2_ref,
                   wih1_ref, whh1_ref, bl1_ref, wih2_ref, whh2_ref, bl2_ref,
                   out_ref, h_ref, c_ref):
    A = a_ref[...]                      # (N, N)
    w1 = w1_ref[...]                    # (F, GH)
    b1 = b1_ref[...]                    # (1, GH)
    w2_row = w2r_ref[...]               # (1, GH)  (gcn_w2 laid out on lanes)
    b2 = b2_ref[0]                      # scalar from SMEM
    wih1 = wih1_ref[...]                # (N, 4H)

    # ---------------- GCN (both layers), batch unrolled ----------------
    pregate_rows = []
    for b in range(B):
        x_b = x_ref[b]                                                      # (N, F)
        xw = jnp.dot(x_b, w1, preferred_element_type=jnp.float32)           # (N, GH)
        h_b = jnp.maximum(
            jnp.dot(A, xw, preferred_element_type=jnp.float32) + b1, 0.0)   # (N, GH)
        # GCN layer 2 (output width 1):  A @ (h @ w2) == (A @ h) @ w2.
        # The 1-wide contraction runs on the VPU (lane reduce), not the MXU.
        ah = jnp.dot(A, h_b, preferred_element_type=jnp.float32)            # (N, GH)
        z_b = jnp.maximum(
            jnp.sum(ah * w2_row, axis=-1, keepdims=True) + b2, 0.0)         # (N, 1)
        # LSTM layer-1 input projection (z_b^T @ Wih1) via sublane reduce,
        # avoiding both a transpose and a 2-row MXU matmul.
        pregate_rows.append(jnp.sum(z_b * wih1, axis=0, keepdims=True))     # (1, 4H)
    pregates1 = jnp.concatenate(pregate_rows, axis=0)                       # (B, 4H)

    # ---------------- 2-layer LSTM, single time step --------------------
    h0 = jnp.zeros((B, H), jnp.float32)   # hidden=None -> zero initial state
    c0 = jnp.zeros((B, H), jnp.float32)

    def cell(pregates, h_prev, c_prev, whh, bias):
        gates = (pregates
                 + jnp.dot(h_prev, whh, preferred_element_type=jnp.float32)
                 + bias)
        i = jax.nn.sigmoid(gates[:, 0:H])
        f = jax.nn.sigmoid(gates[:, H:2 * H])
        g = jnp.tanh(gates[:, 2 * H:3 * H])
        o = jax.nn.sigmoid(gates[:, 3 * H:4 * H])
        c_new = f * c_prev + i * g
        h_new = o * jnp.tanh(c_new)
        return h_new, c_new

    h1, c1 = cell(pregates1, h0, c0, whh1_ref[...], bl1_ref[...])
    # TODO(synk): nn.LSTM inter-layer dropout (p=0.5) is a train-time-only op; omitted (eval semantics).
    pregates2 = jnp.dot(h1, wih2_ref[...], preferred_element_type=jnp.float32)
    h2, c2 = cell(pregates2, h0, c0, whh2_ref[...], bl2_ref[...])

    out_ref[...] = h2          # (B, H) -- encoder_out (seq dim added in wrapper)
    h_ref[0] = h1              # pre-stacked (2, B, H) hidden states
    h_ref[1] = h2
    c_ref[0] = c1              # pre-stacked (2, B, H) cell states
    c_ref[1] = c2


# ------------------------- parameter preparation -----------------------------
def prepare_params(p):
    """One-time prep: transposes / bias sums hoisted out of the forward path."""
    return {
        "gcn_w1": p["gcn_w1"],                               # (F, GH)
        "gcn_b1": p["gcn_b1"].reshape(1, GH),                # (1, GH)
        "gcn_w2_row": p["gcn_w2"].reshape(1, GH),            # (GH,1) -> lane row
        "gcn_b2": p["gcn_b2"].reshape(1),                    # (1,) SMEM scalar
        "w_ih1_t": p["w_ih1"].T,                             # (N, 4H)
        "w_hh1_t": p["w_hh1"].T,                             # (H, 4H)
        "b_l1": (p["b_ih1"] + p["b_hh1"]).reshape(1, 4 * H),
        "w_ih2_t": p["w_ih2"].T,                             # (H, 4H)
        "w_hh2_t": p["w_hh2"].T,                             # (H, 4H)
        "b_l2": (p["b_ih2"] + p["b_hh2"]).reshape(1, 4 * H),
    }


# --------------------------------- forward -----------------------------------
@jax.jit
def encoder_forward(x, A, pp):
    vmem = pl.BlockSpec(memory_space=pltpu.MemorySpace.VMEM)
    smem = pl.BlockSpec(memory_space=pltpu.MemorySpace.SMEM)
    out2d, h_n, c_n = pl.pallas_call(
        encoder_kernel,
        out_shape=(jax.ShapeDtypeStruct((B, H), jnp.float32),      # encoder_out (B,H)
                   jax.ShapeDtypeStruct((2, B, H), jnp.float32),   # h_n
                   jax.ShapeDtypeStruct((2, B, H), jnp.float32)),  # c_n
        in_specs=[vmem, vmem,                 # x, A
                  vmem, vmem, vmem, smem,     # gcn w1, b1, w2_row, b2(scalar)
                  vmem, vmem, vmem,           # lstm layer 1
                  vmem, vmem, vmem],          # lstm layer 2
        out_specs=(vmem, vmem, vmem),
    )(x, A,
      pp["gcn_w1"], pp["gcn_b1"], pp["gcn_w2_row"], pp["gcn_b2"],
      pp["w_ih1_t"], pp["w_hh1_t"], pp["b_l1"],
      pp["w_ih2_t"], pp["w_hh2_t"], pp["b_l2"])
    encoder_out = out2d[:, None, :]            # (B, 1, H), metadata-only reshape
    return encoder_out, (h_n, c_n)


# -------------------------- pure-JAX reference -------------------------------
def encoder_ref(x, A, p):
    h = jnp.einsum('ijk,kl->ijl', x, p["gcn_w1"])
    h = jnp.einsum('ij,kjl->kil', A, h) + p["gcn_b1"]
    h = jax.nn.relu(h)
    z = jnp.einsum('ijk,kl->ijl', h, p["gcn_w2"])
    z = jnp.einsum('ij,kjl->kil', A, z) + p["gcn_b2"]
    z = jax.nn.relu(z)
    inp = z.reshape(B, 1, -1)[:, 0, :]
    hs, cs = [], []
    h_prev = [jnp.zeros((B, H)), jnp.zeros((B, H))]
    c_prev = [jnp.zeros((B, H)), jnp.zeros((B, H))]
    cur = inp
    for l in (1, 2):
        wih, whh = p[f"w_ih{l}"], p[f"w_hh{l}"]
        b = p[f"b_ih{l}"] + p[f"b_hh{l}"]
        gates = cur @ wih.T + h_prev[l - 1] @ whh.T + b
        i, f, g, o = jnp.split(gates, 4, axis=1)
        i, f, g, o = jax.nn.sigmoid(i), jax.nn.sigmoid(f), jnp.tanh(g), jax.nn.sigmoid(o)
        c_new = f * c_prev[l - 1] + i * g
        h_new = o * jnp.tanh(c_new)
        hs.append(h_new); cs.append(c_new)
        cur = h_new
    return cur[:, None, :], (jnp.stack(hs), jnp.stack(cs))


# ---------------------------------- main -------------------------------------
if __name__ == "__main__":
    key = jax.random.PRNGKey(0)
    ks = jax.random.split(key, 16)

    def u(k, shape, stdv):
        return jax.random.uniform(k, shape, jnp.float32, -stdv, stdv)

    params = {
        # GraphConvolution(F -> 128): stdv = 1/sqrt(out)
        "gcn_w1": u(ks[0], (F, GH), 1.0 / math.sqrt(GH)),
        "gcn_b1": u(ks[1], (GH,), 1.0 / math.sqrt(GH)),
        # GraphConvolution(128 -> 1)
        "gcn_w2": u(ks[2], (GH, 1), 1.0),
        "gcn_b2": u(ks[3], (1,), 1.0),
        # LSTM layer 1 (input = N), layer 2 (input = H); stdv = 1/sqrt(H)
        "w_ih1": u(ks[4], (4 * H, N), 1.0 / math.sqrt(H)),
        "w_hh1": u(ks[5], (4 * H, H), 1.0 / math.sqrt(H)),
        "b_ih1": u(ks[6], (4 * H,), 1.0 / math.sqrt(H)),
        "b_hh1": u(ks[7], (4 * H,), 1.0 / math.sqrt(H)),
        "w_ih2": u(ks[8], (4 * H, H), 1.0 / math.sqrt(H)),
        "w_hh2": u(ks[9], (4 * H, H), 1.0 / math.sqrt(H)),
        "b_ih2": u(ks[10], (4 * H,), 1.0 / math.sqrt(H)),
        "b_hh2": u(ks[11], (4 * H,), 1.0 / math.sqrt(H)),
    }

    x = jax.random.normal(ks[12], (B, N, F), jnp.float32)
    A = jax.random.uniform(ks[13], (N, N), jnp.float32)
    A = A / jnp.sum(A, axis=1, keepdims=True)   # row-normalized adjacency

    prepped = prepare_params(params)            # one-time, outside the forward path

    (out, (h_n, c_n)) = encoder_forward(x, A, prepped)
    jax.block_until_ready((out, h_n, c_n))

    (out_r, (h_r, c_r)) = encoder_ref(x, A, params)
    assert out.shape == (B, 1, H) and h_n.shape == (2, B, H) and c_n.shape == (2, B, H)
    assert jnp.allclose(out, out_r, rtol=1e-4, atol=1e-5)
    assert jnp.allclose(h_n, h_r, rtol=1e-4, atol=1e-5)
    assert jnp.allclose(c_n, c_r, rtol=1e-4, atol=1e-5)

    print("KERNEL_OK")
</pallas_src>

<mosaic_0001>
module attributes {stable_mosaic.version = 11 : i64} {
  func.func @encoder_kernel(%arg0: memref<2x16x4xf32, #tpu.memory_space<vmem>>, %arg1: memref<16x16xf32, #tpu.memory_space<vmem>>, %arg2: memref<4x128xf32, #tpu.memory_space<vmem>>, %arg3: memref<1x128xf32, #tpu.memory_space<vmem>>, %arg4: memref<1x128xf32, #tpu.memory_space<vmem>>, %arg5: memref<1xf32, #tpu.memory_space<smem>>, %arg6: memref<16x128xf32, #tpu.memory_space<vmem>>, %arg7: memref<32x128xf32, #tpu.memory_space<vmem>>, %arg8: memref<1x128xf32, #tpu.memory_space<vmem>>, %arg9: memref<32x128xf32, #tpu.memory_space<vmem>>, %arg10: memref<32x128xf32, #tpu.memory_space<vmem>>, %arg11: memref<1x128xf32, #tpu.memory_space<vmem>>, %arg12: memref<2x32xf32, #tpu.memory_space<vmem>>, %arg13: memref<2x2x32xf32, #tpu.memory_space<vmem>>, %arg14: memref<2x2x32xf32, #tpu.memory_space<vmem>>) attributes {dimension_semantics = [], scalar_prefetch = 0 : i64, scratch_operands = 0 : i64, tpu.core_type = #tpu.core_type<tc>} {
    %c0 = arith.constant 0 : index
    %c0_0 = arith.constant 0 : index
    %0 = vector.load %arg1[%c0, %c0_0] : memref<16x16xf32, #tpu.memory_space<vmem>>, vector<16x16xf32>
    %c0_1 = arith.constant 0 : index
    %c0_2 = arith.constant 0 : index
    %1 = vector.load %arg2[%c0_1, %c0_2] : memref<4x128xf32, #tpu.memory_space<vmem>>, vector<4x128xf32>
    %c0_3 = arith.constant 0 : index
    %c0_4 = arith.constant 0 : index
    %2 = vector.load %arg3[%c0_3, %c0_4] : memref<1x128xf32, #tpu.memory_space<vmem>>, vector<1x128xf32>
    %c0_5 = arith.constant 0 : index
    %c0_6 = arith.constant 0 : index
    %3 = vector.load %arg4[%c0_5, %c0_6] : memref<1x128xf32, #tpu.memory_space<vmem>>, vector<1x128xf32>
    %c0_7 = arith.constant 0 : index
    %4 = memref.load %arg5[%c0_7] : memref<1xf32, #tpu.memory_space<smem>>
    %c0_8 = arith.constant 0 : index
    %c0_9 = arith.constant 0 : index
    %5 = vector.load %arg6[%c0_8, %c0_9] : memref<16x128xf32, #tpu.memory_space<vmem>>, vector<16x128xf32>
    %c0_10 = arith.constant 0 : index
    %c0_11 = arith.constant 0 : index
    %c0_12 = arith.constant 0 : index
    %6 = vector.load %arg0[%c0_10, %c0_11, %c0_12] : memref<2x16x4xf32, #tpu.memory_space<vmem>>, vector<1x16x4xf32>
    %7 = vector.shape_cast %6 : vector<1x16x4xf32> to vector<16x4xf32>
    %cst = arith.constant dense<0.000000e+00> : vector<16x128xf32>
    %8 = tpu.matmul %7, %1, %cst {dimension_numbers = #tpu.dot_dimension_numbers<[1], [0], [0], [1], [0, 0, 1, 1], [], []>} : vector<16x4xf32>, vector<4x128xf32>, vector<16x128xf32> -> vector<16x128xf32>
    %cst_13 = arith.constant dense<0.000000e+00> : vector<16x128xf32>
    %9 = tpu.matmul %0, %8, %cst_13 {dimension_numbers = #tpu.dot_dimension_numbers<[1], [0], [0], [1], [0, 0, 1, 1], [], []>} : vector<16x16xf32>, vector<16x128xf32>, vector<16x128xf32> -> vector<16x128xf32>
    %10 = vector.broadcast %2 : vector<1x128xf32> to vector<16x128xf32>
    %11 = arith.addf %9, %10 : vector<16x128xf32>
    %cst_14 = arith.constant 0.000000e+00 : f32
    %12 = vector.broadcast %cst_14 : f32 to vector<16x128xf32>
    %13 = arith.maximumf %11, %12 : vector<16x128xf32>
    %cst_15 = arith.constant dense<0.000000e+00> : vector<16x128xf32>
    %14 = tpu.matmul %0, %13, %cst_15 {dimension_numbers = #tpu.dot_dimension_numbers<[1], [0], [0], [1], [0, 0, 1, 1], [], []>} : vector<16x16xf32>, vector<16x128xf32>, vector<16x128xf32> -> vector<16x128xf32>
    %15 = vector.broadcast %3 : vector<1x128xf32> to vector<16x128xf32>
    %16 = arith.mulf %14, %15 : vector<16x128xf32>
    %cst_16 = arith.constant dense<0.000000e+00> : vector<16xf32>
    %17 = vector.multi_reduction <add>, %16, %cst_16 [1] : vector<16x128xf32> to vector<16xf32>
    %18 = vector.shape_cast %17 : vector<16xf32> to vector<16x1xf32>
    %19 = vector.broadcast %4 : f32 to vector<16x1xf32>
    %20 = arith.addf %18, %19 : vector<16x1xf32>
    %cst_17 = arith.constant 0.000000e+00 : f32
    %21 = vector.broadcast %cst_17 : f32 to vector<16x1xf32>
    %22 = arith.maximumf %20, %21 : vector<16x1xf32>
    %23 = vector.broadcast %22 : vector<16x1xf32> to vector<16x128xf32>
    %24 = arith.mulf %23, %5 : vector<16x128xf32>
    %cst_18 = arith.constant dense<0.000000e+00> : vector<128xf32>
    %25 = vector.multi_reduction <add>, %24, %cst_18 [0] : vector<16x128xf32> to vector<128xf32>
    %26 = vector.shape_cast %25 : vector<128xf32> to vector<1x128xf32>
    %c1 = arith.constant 1 : index
    %c0_19 = arith.constant 0 : index
    %c0_20 = arith.constant 0 : index
    %27 = vector.load %arg0[%c1, %c0_19, %c0_20] : memref<2x16x4xf32, #tpu.memory_space<vmem>>, vector<1x16x4xf32>
    %28 = vector.shape_cast %27 : vector<1x16x4xf32> to vector<16x4xf32>
    %cst_21 = arith.constant dense<0.000000e+00> : vector<16x128xf32>
    %29 = tpu.matmul %28, %1, %cst_21 {dimension_numbers = #tpu.dot_dimension_numbers<[1], [0], [0], [1], [0, 0, 1, 1], [], []>} : vector<16x4xf32>, vector<4x128xf32>, vector<16x128xf32> -> vector<16x128xf32>
    %cst_22 = arith.constant dense<0.000000e+00> : vector<16x128xf32>
    %30 = tpu.matmul %0, %29, %cst_22 {dimension_numbers = #tpu.dot_dimension_numbers<[1], [0], [0], [1], [0, 0, 1, 1], [], []>} : vector<16x16xf32>, vector<16x128xf32>, vector<16x128xf32> -> vector<16x128xf32>
    %31 = vector.broadcast %2 : vector<1x128xf32> to vector<16x128xf32>
    %32 = arith.addf %30, %31 : vector<16x128xf32>
    %cst_23 = arith.constant 0.000000e+00 : f32
    %33 = vector.broadcast %cst_23 : f32 to vector<16x128xf32>
    %34 = arith.maximumf %32, %33 : vector<16x128xf32>
    %cst_24 = arith.constant dense<0.000000e+00> : vector<16x128xf32>
    %35 = tpu.matmul %0, %34, %cst_24 {dimension_numbers = #tpu.dot_dimension_numbers<[1], [0], [0], [1], [0, 0, 1, 1], [], []>} : vector<16x16xf32>, vector<16x128xf32>, vector<16x128xf32> -> vector<16x128xf32>
    %36 = vector.broadcast %3 : vector<1x128xf32> to vector<16x128xf32>
    %37 = arith.mulf %35, %36 : vector<16x128xf32>
    %cst_25 = arith.constant dense<0.000000e+00> : vector<16xf32>
    %38 = vector.multi_reduction <add>, %37, %cst_25 [1] : vector<16x128xf32> to vector<16xf32>
    %39 = vector.shape_cast %38 : vector<16xf32> to vector<16x1xf32>
    %40 = vector.broadcast %4 : f32 to vector<16x1xf32>
    %41 = arith.addf %39, %40 : vector<16x1xf32>
    %cst_26 = arith.constant 0.000000e+00 : f32
    %42 = vector.broadcast %cst_26 : f32 to vector<16x1xf32>
    %43 = arith.maximumf %41, %42 : vector<16x1xf32>
    %44 = vector.broadcast %43 : vector<16x1xf32> to vector<16x128xf32>
    %45 = arith.mulf %44, %5 : vector<16x128xf32>
    %cst_27 = arith.constant dense<0.000000e+00> : vector<128xf32>
    %46 = vector.multi_reduction <add>, %45, %cst_27 [0] : vector<16x128xf32> to vector<128xf32>
    %47 = vector.shape_cast %46 : vector<128xf32> to vector<1x128xf32>
    %48 = tpu.concatenate %26, %47 in 0 : vector<1x128xf32>, vector<1x128xf32> -> vector<2x128xf32>
    %cst_28 = arith.constant 0.000000e+00 : f32
    %49 = vector.broadcast %cst_28 : f32 to vector<2x32xf32>
    %cst_29 = arith.constant 0.000000e+00 : f32
    %50 = vector.broadcast %cst_29 : f32 to vector<2x32xf32>
    %c0_30 = arith.constant 0 : index
    %c0_31 = arith.constant 0 : index
    %51 = vector.load %arg7[%c0_30, %c0_31] : memref<32x128xf32, #tpu.memory_space<vmem>>, vector<32x128xf32>
    %c0_32 = arith.constant 0 : index
    %c0_33 = arith.constant 0 : index
    %52 = vector.load %arg8[%c0_32, %c0_33] : memref<1x128xf32, #tpu.memory_space<vmem>>, vector<1x128xf32>
    %cst_34 = arith.constant dense<0.000000e+00> : vector<2x128xf32>
    %53 = tpu.matmul %49, %51, %cst_34 {dimension_numbers = #tpu.dot_dimension_numbers<[1], [0], [0], [1], [0, 0, 1, 1], [], []>} : vector<2x32xf32>, vector<32x128xf32>, vector<2x128xf32> -> vector<2x128xf32>
    %54 = arith.addf %48, %53 : vector<2x128xf32>
    %55 = vector.broadcast %52 : vector<1x128xf32> to vector<2x128xf32>
    %56 = arith.addf %54, %55 : vector<2x128xf32>
    %57 = vector.extract_strided_slice %56 {offsets = [0, 0], sizes = [2, 32], strides = [1, 1]} : vector<2x128xf32> to vector<2x32xf32>
    %58 = arith.negf %57 : vector<2x32xf32>
    %59 = math.exp %58 : vector<2x32xf32>
    %cst_35 = arith.constant 1.000000e+00 : f32
    %60 = vector.broadcast %cst_35 : f32 to vector<2x32xf32>
    %61 = arith.addf %60, %59 : vector<2x32xf32>
    %62 = arith.divf %60, %61 : vector<2x32xf32>
    %63 = vector.extract_strided_slice %56 {offsets = [0, 32], sizes = [2, 32], strides = [1, 1]} : vector<2x128xf32> to vector<2x32xf32>
    %64 = arith.negf %63 : vector<2x32xf32>
    %65 = math.exp %64 : vector<2x32xf32>
    %cst_36 = arith.constant 1.000000e+00 : f32
    %66 = vector.broadcast %cst_36 : f32 to vector<2x32xf32>
    %67 = arith.addf %66, %65 : vector<2x32xf32>
    %68 = arith.divf %66, %67 : vector<2x32xf32>
    %69 = vector.extract_strided_slice %56 {offsets = [0, 64], sizes = [2, 32], strides = [1, 1]} : vector<2x128xf32> to vector<2x32xf32>
    %70 = math.tanh %69 : vector<2x32xf32>
    %71 = vector.extract_strided_slice %56 {offsets = [0, 96], sizes = [2, 32], strides = [1, 1]} : vector<2x128xf32> to vector<2x32xf32>
    %72 = arith.negf %71 : vector<2x32xf32>
    %73 = math.exp %72 : vector<2x32xf32>
    %cst_37 = arith.constant 1.000000e+00 : f32
    %74 = vector.broadcast %cst_37 : f32 to vector<2x32xf32>
    %75 = arith.addf %74, %73 : vector<2x32xf32>
    %76 = arith.divf %74, %75 : vector<2x32xf32>
    %77 = arith.mulf %68, %50 : vector<2x32xf32>
    %78 = arith.mulf %62, %70 : vector<2x32xf32>
    %79 = arith.addf %77, %78 : vector<2x32xf32>
    %80 = math.tanh %79 : vector<2x32xf32>
    %81 = arith.mulf %76, %80 : vector<2x32xf32>
    %c0_38 = arith.constant 0 : index
    %c0_39 = arith.constant 0 : index
    %82 = vector.load %arg9[%c0_38, %c0_39] : memref<32x128xf32, #tpu.memory_space<vmem>>, vector<32x128xf32>
    %cst_40 = arith.constant dense<0.000000e+00> : vector<2x128xf32>
    %83 = tpu.matmul %81, %82, %cst_40 {dimension_numbers = #tpu.dot_dimension_numbers<[1], [0], [0], [1], [0, 0, 1, 1], [], []>} : vector<2x32xf32>, vector<32x128xf32>, vector<2x128xf32> -> vector<2x128xf32>
    %c0_41 = arith.constant 0 : index
    %c0_42 = arith.constant 0 : index
    %84 = vector.load %arg10[%c0_41, %c0_42] : memref<32x128xf32, #tpu.memory_space<vmem>>, vector<32x128xf32>
    %c0_43 = arith.constant 0 : index
    %c0_44 = arith.constant 0 : index
    %85 = vector.load %arg11[%c0_43, %c0_44] : memref<1x128xf32, #tpu.memory_space<vmem>>, vector<1x128xf32>
    %cst_45 = arith.constant dense<0.000000e+00> : vector<2x128xf32>
    %86 = tpu.matmul %49, %84, %cst_45 {dimension_numbers = #tpu.dot_dimension_numbers<[1], [0], [0], [1], [0, 0, 1, 1], [], []>} : vector<2x32xf32>, vector<32x128xf32>, vector<2x128xf32> -> vector<2x128xf32>
    %87 = arith.addf %83, %86 : vector<2x128xf32>
    %88 = vector.broadcast %85 : vector<1x128xf32> to vector<2x128xf32>
    %89 = arith.addf %87, %88 : vector<2x128xf32>
    %90 = vector.extract_strided_slice %89 {offsets = [0, 0], sizes = [2, 32], strides = [1, 1]} : vector<2x128xf32> to vector<2x32xf32>
    %91 = arith.negf %90 : vector<2x32xf32>
    %92 = math.exp %91 : vector<2x32xf32>
    %cst_46 = arith.constant 1.000000e+00 : f32
    %93 = vector.broadcast %cst_46 : f32 to vector<2x32xf32>
    %94 = arith.addf %93, %92 : vector<2x32xf32>
    %95 = arith.divf %93, %94 : vector<2x32xf32>
    %96 = vector.extract_strided_slice %89 {offsets = [0, 32], sizes = [2, 32], strides = [1, 1]} : vector<2x128xf32> to vector<2x32xf32>
    %97 = arith.negf %96 : vector<2x32xf32>
    %98 = math.exp %97 : vector<2x32xf32>
    %cst_47 = arith.constant 1.000000e+00 : f32
    %99 = vector.broadcast %cst_47 : f32 to vector<2x32xf32>
    %100 = arith.addf %99, %98 : vector<2x32xf32>
    %101 = arith.divf %99, %100 : vector<2x32xf32>
    %102 = vector.extract_strided_slice %89 {offsets = [0, 64], sizes = [2, 32], strides = [1, 1]} : vector<2x128xf32> to vector<2x32xf32>
    %103 = math.tanh %102 : vector<2x32xf32>
    %104 = vector.extract_strided_slice %89 {offsets = [0, 96], sizes = [2, 32], strides = [1, 1]} : vector<2x128xf32> to vector<2x32xf32>
    %105 = arith.negf %104 : vector<2x32xf32>
    %106 = math.exp %105 : vector<2x32xf32>
    %cst_48 = arith.constant 1.000000e+00 : f32
    %107 = vector.broadcast %cst_48 : f32 to vector<2x32xf32>
    %108 = arith.addf %107, %106 : vector<2x32xf32>
    %109 = arith.divf %107, %108 : vector<2x32xf32>
    %110 = arith.mulf %101, %50 : vector<2x32xf32>
    %111 = arith.mulf %95, %103 : vector<2x32xf32>
    %112 = arith.addf %110, %111 : vector<2x32xf32>
    %113 = math.tanh %112 : vector<2x32xf32>
    %114 = arith.mulf %109, %113 : vector<2x32xf32>
    %c0_49 = arith.constant 0 : index
    %c0_50 = arith.constant 0 : index
    %115 = vector.load %arg12[%c0_49, %c0_50] : memref<2x32xf32, #tpu.memory_space<vmem>>, vector<2x32xf32>
    tpu.vector_store %arg12[%c0_49, %c0_50], %114 {strides = array<i32>} : memref<2x32xf32, #tpu.memory_space<vmem>>, vector<2x32xf32>,
    %c0_51 = arith.constant 0 : index
    %c0_52 = arith.constant 0 : index
    %c0_53 = arith.constant 0 : index
    %116 = vector.load %arg13[%c0_51, %c0_52, %c0_53] : memref<2x2x32xf32, #tpu.memory_space<vmem>>, vector<1x2x32xf32>
    %117 = vector.shape_cast %116 : vector<1x2x32xf32> to vector<2x32xf32>
    %118 = vector.shape_cast %81 : vector<2x32xf32> to vector<1x2x32xf32>
    tpu.vector_store %arg13[%c0_51, %c0_52, %c0_53], %118 {strides = array<i32>} : memref<2x2x32xf32, #tpu.memory_space<vmem>>, vector<1x2x32xf32>,
    %c1_54 = arith.constant 1 : index
    %c0_55 = arith.constant 0 : index
    %c0_56 = arith.constant 0 : index
    %119 = vector.load %arg13[%c1_54, %c0_55, %c0_56] : memref<2x2x32xf32, #tpu.memory_space<vmem>>, vector<1x2x32xf32>
    %120 = vector.shape_cast %119 : vector<1x2x32xf32> to vector<2x32xf32>
    %121 = vector.shape_cast %114 : vector<2x32xf32> to vector<1x2x32xf32>
    tpu.vector_store %arg13[%c1_54, %c0_55, %c0_56], %121 {strides = array<i32>} : memref<2x2x32xf32, #tpu.memory_space<vmem>>, vector<1x2x32xf32>,
    %c0_57 = arith.constant 0 : index
    %c0_58 = arith.constant 0 : index
    %c0_59 = arith.constant 0 : index
    %122 = vector.load %arg14[%c0_57, %c0_58, %c0_59] : memref<2x2x32xf32, #tpu.memory_space<vmem>>, vector<1x2x32xf32>
    %123 = vector.shape_cast %122 : vector<1x2x32xf32> to vector<2x32xf32>
    %124 = vector.shape_cast %79 : vector<2x32xf32> to vector<1x2x32xf32>
    tpu.vector_store %arg14[%c0_57, %c0_58, %c0_59], %124 {strides = array<i32>} : memref<2x2x32xf32, #tpu.memory_space<vmem>>, vector<1x2x32xf32>,
    %c1_60 = arith.constant 1 : index
    %c0_61 = arith.constant 0 : index
    %c0_62 = arith.constant 0 : index
    %125 = vector.load %arg14[%c1_60, %c0_61, %c0_62] : memref<2x2x32xf32, #tpu.memory_space<vmem>>, vector<1x2x32xf32>
    %126 = vector.shape_cast %125 : vector<1x2x32xf32> to vector<2x32xf32>
    %127 = vector.shape_cast %112 : vector<2x32xf32> to vector<1x2x32xf32>
    tpu.vector_store %arg14[%c1_60, %c0_61, %c0_62], %127 {strides = array<i32>} : memref<2x2x32xf32, #tpu.memory_space<vmem>>, vector<1x2x32xf32>,
    return
  }
}

</mosaic_0001>

<llo_original>
// kernel: encoder_forward.1
$region0: #{encoder_forward.1}
  #allocation0 [shape = 'u32[]', space=smem, size = 0x4, offset = 0x4, fixed_abs, tag = 'smem constant byte address 0x4 - core index']
  #allocation1 [shape = 'u32[72,128]{1,0:T(1,128)}', space=vmem, size = 0x9000, scoped, tag = 'internal scratch']
  #allocation2 [shape = 'f32[1]{0:T(128)S(6)}', space=smem, size = 0x200, scoped, tag = 'scoped memory for encoder_forward.1']
  %s0 = inlined_call_operand.vmem [shape: f32[2,16,4], index: 0, kind: input, shape index: {}]
  %s1 = inlined_call_operand.vmem [shape: f32[16,16], index: 1, kind: input, shape index: {}]
  %s2 = inlined_call_operand.hbm [shape: f32[4,128], index: 2, kind: input, shape index: {}]
  %s3 = inlined_call_operand.hbm [shape: f32[1,128], index: 3, kind: input, shape index: {}]
  %s4 = inlined_call_operand.hbm [shape: f32[1,128], index: 4, kind: input, shape index: {}]
  %s5 = inlined_call_operand.<no memory space> [shape: f32[1], index: 5, kind: input, shape index: {}]
  %s6 = inlined_call_operand.hbm [shape: f32[16,128], index: 6, kind: input, shape index: {}]
  %s7 = inlined_call_operand.vmem [shape: f32[32,128], index: 7, kind: input, shape index: {}]
  %s8 = inlined_call_operand.hbm [shape: f32[1,128], index: 8, kind: input, shape index: {}]
  %s9 = inlined_call_operand.hbm [shape: f32[32,128], index: 9, kind: input, shape index: {}]
  %s10 = inlined_call_operand.hbm [shape: f32[32,128], index: 10, kind: input, shape index: {}]
  %s11 = inlined_call_operand.hbm [shape: f32[1,128], index: 11, kind: input, shape index: {}]
  %s12 = inlined_call_operand.hbm [shape: f32[2,32], index: 12, kind: output, shape index: {0}]
  %s13 = inlined_call_operand.hbm [shape: f32[2,2,32], index: 13, kind: output, shape index: {1}]
  %s14 = inlined_call_operand.hbm [shape: f32[2,2,32], index: 14, kind: output, shape index: {2}]
  %15 = xla_tuple %s12, %s13, %s14
  %s16 = sld [smem:[#allocation0]]
  $region106: #{encoder_forward.1} parent=0
    _
  %s18 = ssub.s32 1, %s16
  %s19 = scalar_select 0, %s18, %s16
  %20 = sst [smem:[#allocation2]] %s5
  $region1: #{encoder_forward.1} parent=0
    #allocation3 [shape = 'u8[2048]{0}', space=vmem, size = 0x800, scoped, tag = 'input window, operand 2, single buffered']
    #allocation4 [shape = 's32[1]{0}', space=sflag, size = 0x4, scoped, tag = 'scoped memory for encoder_forward.1']
    #allocation5 [shape = 's32[1]{0}', space=sflag, size = 0x4, scoped, tag = 'scoped memory for encoder_forward.1']
    #allocation6 [shape = 'u8[512]{0}', space=vmem, size = 0x400, scoped, tag = 'input window, operand 3, single buffered']
    #allocation7 [shape = 's32[1]{0}', space=sflag, size = 0x4, scoped, tag = 'scoped memory for encoder_forward.1']
    #allocation8 [shape = 'u8[512]{0}', space=vmem, size = 0x400, scoped, tag = 'input window, operand 4, single buffered']
    #allocation9 [shape = 'u8[8192]{0}', space=vmem, size = 0x2000, scoped, tag = 'input window, operand 6, single buffered']
    #allocation10 [shape = 's32[1]{0}', space=sflag, size = 0x4, scoped, tag = 'scoped memory for encoder_forward.1']
    #allocation11 [shape = 'u8[512]{0}', space=vmem, size = 0x400, scoped, tag = 'input window, operand 8, single buffered']
    #allocation12 [shape = 'u8[16384]{0}', space=vmem, size = 0x4000, scoped, tag = 'input window, operand 9, single buffered']
    #allocation13 [shape = 's32[1]{0}', space=sflag, size = 0x4, scoped, tag = 'scoped memory for encoder_forward.1']
    #allocation14 [shape = 'u8[16384]{0}', space=vmem, size = 0x4000, scoped, tag = 'input window, operand 10, single buffered']
    #allocation15 [shape = 'u8[512]{0}', space=vmem, size = 0x400, scoped, tag = 'input window, operand 11, single buffered']
    #allocation16 [shape = 's32[1]{0}', space=sflag, size = 0x4, scoped, tag = 'scoped memory for encoder_forward.1']
    #allocation17 [shape = 'u8[1024]{0}', space=vmem, size = 0x400, scoped, tag = 'output window, operand 0, single buffered']
    #allocation18 [shape = 'u8[2048]{0}', space=vmem, size = 0x800, scoped, tag = 'output window, operand 1, single buffered']
    #allocation19 [shape = 's32[1]{0}', space=sflag, size = 0x4, scoped, tag = 'scoped memory for encoder_forward.1']
    #allocation20 [shape = 'u8[2048]{0}', space=vmem, size = 0x800, scoped, tag = 'output window, operand 2, single buffered']
    %21 = vsyncpa [#allocation4], 0
    %22 = vsyncpa [#allocation7], 0
    %23 = vsyncpa [#allocation10], 0
    %24 = vsyncpa [#allocation13], 0
    %25 = vsyncpa [#allocation16], 0
    %26 = vsyncpa [#allocation5], 0
    %27 = vsyncpa [#allocation19], 0
    // Predicated region
    $region2: #{encoder_forward.1} parent=1 // pred_check
      _
    $region3: #{encoder_forward.1} parent=1 // pred_check_branch
      %29 = sbr.rel (0) target = $region5
    $region4: #{encoder_forward.1} parent=1 // pred_region
      _
    $region5: #{encoder_forward.1} parent=1 // pred_fallthru
      _
    // Predicated region
    $region6: #{encoder_forward.1} parent=1 // pred_check
      _
    $region7: #{encoder_forward.1} parent=1 // pred_check_branch
      %31 = sbr.rel (0) target = $region9
    $region8: #{encoder_forward.1} parent=1 // pred_region
      _
    $region9: #{encoder_forward.1} parent=1 // pred_fallthru
      _
    // Predicated region
    $region10: #{encoder_forward.1} parent=1 // pred_check
      _
    $region11: #{encoder_forward.1} parent=1 // pred_check_branch
      %33 = sbr.rel (0) target = $region13
    $region12: #{encoder_forward.1} parent=1 // pred_region
      %35 = vsyncadd [#allocation4], 0
      %s37 = sshll.u32 %s2, 4
      %s38 = int_to_ptr.hbm [resolvable:$true] %s37
      %s39 = sshll.u32 [#allocation3], 4
      %s40 = int_to_ptr.vmem [resolvable:$true] %s39
      %42 = dma.hbm_to_vmem [thread:$0]  %s38, 64, %s40, [#allocation4]
    $region13: #{encoder_forward.1} parent=1 // pred_fallthru
      _
    // Predicated region
    $region14: #{encoder_forward.1} parent=1 // pred_check
      _
    $region15: #{encoder_forward.1} parent=1 // pred_check_branch
      %44 = sbr.rel (0) target = $region17
    $region16: #{encoder_forward.1} parent=1 // pred_region
      %46 = vsyncadd [#allocation7], 0
      %s48 = sshll.u32 %s3, 4
      %s49 = int_to_ptr.hbm [resolvable:$true] %s48
      %s50 = sshll.u32 [#allocation6], 4
      %s51 = int_to_ptr.vmem [resolvable:$true] %s50
      %53 = dma.hbm_to_vmem [thread:$0]  %s49, 16, %s51, [#allocation7]
    $region17: #{encoder_forward.1} parent=1 // pred_fallthru
      _
    // Predicated region
    $region18: #{encoder_forward.1} parent=1 // pred_check
      _
    $region19: #{encoder_forward.1} parent=1 // pred_check_branch
      %55 = sbr.rel (0) target = $region21
    $region20: #{encoder_forward.1} parent=1 // pred_region
      %57 = vsyncadd [#allocation7], 0
      %s59 = sshll.u32 %s4, 4
      %s60 = int_to_ptr.hbm [resolvable:$true] %s59
      %s61 = sshll.u32 [#allocation8], 4
      %s62 = int_to_ptr.vmem [resolvable:$true] %s61
      %64 = dma.hbm_to_vmem [thread:$0]  %s60, 16, %s62, [#allocation7]
    $region21: #{encoder_forward.1} parent=1 // pred_fallthru
      _
    // Predicated region
    $region22: #{encoder_forward.1} parent=1 // pred_check
      _
    $region23: #{encoder_forward.1} parent=1 // pred_check_branch
      %66 = sbr.rel (0) target = $region25
    $region24: #{encoder_forward.1} parent=1 // pred_region
      _
    $region25: #{encoder_forward.1} parent=1 // pred_fallthru
      _
    // Predicated region
    $region26: #{encoder_forward.1} parent=1 // pred_check
      _
    $region27: #{encoder_forward.1} parent=1 // pred_check_branch
      %68 = sbr.rel (0) target = $region29
    $region28: #{encoder_forward.1} parent=1 // pred_region
      %70 = vsyncadd [#allocation10], 0
      %s71 = sshll.u32 %s6, 4
      %s72 = int_to_ptr.hbm [resolvable:$true] %s71
      %s73 = sshll.u32 [#allocation9], 4
      %s74 = int_to_ptr.vmem [resolvable:$true] %s73
      %79 = dma.hbm_to_vmem [thread:$0]  %s72, 256, %s74, [#allocation10], 128, 128, 8
    $region29: #{encoder_forward.1} parent=1 // pred_fallthru
      _
    // Predicated region
    $region30: #{encoder_forward.1} parent=1 // pred_check
      _
    $region31: #{encoder_forward.1} parent=1 // pred_check_branch
      %81 = sbr.rel (0) target = $region33
    $region32: #{encoder_forward.1} parent=1 // pred_region
      _
    $region33: #{encoder_forward.1} parent=1 // pred_fallthru
      _
    // Predicated region
    $region34: #{encoder_forward.1} parent=1 // pred_check
      _
    $region35: #{encoder_forward.1} parent=1 // pred_check_branch
      %83 = sbr.rel (0) target = $region37
    $region36: #{encoder_forward.1} parent=1 // pred_region
      %85 = vsyncadd [#allocation10], 0
      %s87 = sshll.u32 %s8, 4
      %s88 = int_to_ptr.hbm [resolvable:$true] %s87
      %s89 = sshll.u32 [#allocation11], 4
      %s90 = int_to_ptr.vmem [resolvable:$true] %s89
      %92 = dma.hbm_to_vmem [thread:$0]  %s88, 16, %s90, [#allocation10]
    $region37: #{encoder_forward.1} parent=1 // pred_fallthru
      _
    // Predicated region
    $region38: #{encoder_forward.1} parent=1 // pred_check
      _
    $region39: #{encoder_forward.1} parent=1 // pred_check_branch
      %94 = sbr.rel (0) target = $region41
    $region40: #{encoder_forward.1} parent=1 // pred_region
      %96 = vsyncadd [#allocation13], 0
      %s97 = sshll.u32 %s9, 4
      %s98 = int_to_ptr.hbm [resolvable:$true] %s97
      %s99 = sshll.u32 [#allocation12], 4
      %s100 = int_to_ptr.vmem [resolvable:$true] %s99
      %105 = dma.hbm_to_vmem [thread:$0]  %s98, 512, %s100, [#allocation13], 128, 128, 8
    $region41: #{encoder_forward.1} parent=1 // pred_fallthru
      _
    // Predicated region
    $region42: #{encoder_forward.1} parent=1 // pred_check
      _
    $region43: #{encoder_forward.1} parent=1 // pred_check_branch
      %107 = sbr.rel (0) target = $region45
    $region44: #{encoder_forward.1} parent=1 // pred_region
      %109 = vsyncadd [#allocation13], 0
      %s110 = sshll.u32 %s10, 4
      %s111 = int_to_ptr.hbm [resolvable:$true] %s110
      %s112 = sshll.u32 [#allocation14], 4
      %s113 = int_to_ptr.vmem [resolvable:$true] %s112
      %118 = dma.hbm_to_vmem [thread:$0]  %s111, 512, %s113, [#allocation13], 128, 128, 8
    $region45: #{encoder_forward.1} parent=1 // pred_fallthru
      _
    // Predicated region
    $region46: #{encoder_forward.1} parent=1 // pred_check
      _
    $region47: #{encoder_forward.1} parent=1 // pred_check_branch
      %120 = sbr.rel (0) target = $region49
    $region48: #{encoder_forward.1} parent=1 // pred_region
      %122 = vsyncadd [#allocation16], 0
      %s124 = sshll.u32 %s11, 4
      %s125 = int_to_ptr.hbm [resolvable:$true] %s124
      %s126 = sshll.u32 [#allocation15], 4
      %s127 = int_to_ptr.vmem [resolvable:$true] %s126
      %129 = dma.hbm_to_vmem [thread:$0]  %s125, 16, %s127, [#allocation16]
    $region49: #{encoder_forward.1} parent=1 // pred_fallthru
      _
    // Predicated region
    $region50: #{encoder_forward.1} parent=1 // pred_check
      _
    $region51: #{encoder_forward.1} parent=1 // pred_check_branch
      %131 = sbr.rel (0) target = $region53
    $region52: #{encoder_forward.1} parent=1 // pred_region
      %133 = dma.done [#allocation4], 64
    $region53: #{encoder_forward.1} parent=1 // pred_fallthru
      _
    // Predicated region
    $region54: #{encoder_forward.1} parent=1 // pred_check
      _
    $region55: #{encoder_forward.1} parent=1 // pred_check_branch
      %135 = sbr.rel (0) target = $region57
    $region56: #{encoder_forward.1} parent=1 // pred_region
      %137 = dma.done [#allocation7], 16
    $region57: #{encoder_forward.1} parent=1 // pred_fallthru
      _
    // Predicated region
    $region58: #{encoder_forward.1} parent=1 // pred_check
      _
    $region59: #{encoder_forward.1} parent=1 // pred_check_branch
      %139 = sbr.rel (0) target = $region61
    $region60: #{encoder_forward.1} parent=1 // pred_region
      %141 = dma.done [#allocation7], 16
    $region61: #{encoder_forward.1} parent=1 // pred_fallthru
      _
    // Predicated region
    $region62: #{encoder_forward.1} parent=1 // pred_check
      _
    $region63: #{encoder_forward.1} parent=1 // pred_check_branch
      %143 = sbr.rel (0) target = $region65
    $region64: #{encoder_forward.1} parent=1 // pred_region
      %145 = dma.done [#allocation10], 256
    $region65: #{encoder_forward.1} parent=1 // pred_fallthru
      _
    // Predicated region
    $region66: #{encoder_forward.1} parent=1 // pred_check
      _
    $region67: #{encoder_forward.1} parent=1 // pred_check_branch
      %147 = sbr.rel (0) target = $region69
    $region68: #{encoder_forward.1} parent=1 // pred_region
      %149 = dma.done [#allocation10], 16
    $region69: #{encoder_forward.1} parent=1 // pred_fallthru
      _
    // Predicated region
    $region70: #{encoder_forward.1} parent=1 // pred_check
      _
    $region71: #{encoder_forward.1} parent=1 // pred_check_branch
      %151 = sbr.rel (0) target = $region73
    $region72: #{encoder_forward.1} parent=1 // pred_region
      %153 = dma.done [#allocation13], 512
    $region73: #{encoder_forward.1} parent=1 // pred_fallthru
      _
    // Predicated region
    $region74: #{encoder_forward.1} parent=1 // pred_check
      _
    $region75: #{encoder_forward.1} parent=1 // pred_check_branch
      %155 = sbr.rel (0) target = $region77
    $region76: #{encoder_forward.1} parent=1 // pred_region
      %157 = dma.done [#allocation13], 512
    $region77: #{encoder_forward.1} parent=1 // pred_fallthru
      _
    // Predicated region
    $region78: #{encoder_forward.1} parent=1 // pred_check
      _
    $region79: #{encoder_forward.1} parent=1 // pred_check_branch
      %159 = sbr.rel (0) target = $region81
    $region80: #{encoder_forward.1} parent=1 // pred_region
      %161 = dma.done [#allocation16], 16
    $region81: #{encoder_forward.1} parent=1 // pred_fallthru
      _
    %v162 = vld [vmem:[%s1] sm:$0xff]
    %v163 = vld [vmem:[%s1 + $0x8] sm:$0xff]
    %v164 = vld [vmem:[#allocation3] sm:$0xf]
    %v165 = vld [vmem:[#allocation6] sm:$0x1]
    %v166 = vld [vmem:[#allocation8] sm:$0x1]
    %s167 = sld [smem:[#allocation2]]
    %v168 = vld [vmem:[#allocation9] sm:$0xff]
    %v169 = vld [vmem:[#allocation9 + $0x8] sm:$0xff]
    %v170 = vld [vmem:[%s0] sm:$0xff]
    %v171 = vld [vmem:[%s0 + $0x8] sm:$0xff]
    %vm172 = vcmask 31744
    %v174 = vsel %vm172, %v170, 0
    %v177 = vsel %vm172, %v171, 0
    %vm179 = vcmask 1043456
    %v181 = vsel %vm179, %v164, 0
    %183 = vmatpush.msra.mxu0 0.0
    %184 = vmatpush.msra.mxu0 0.0
    %185 = vmatpush.msra.mxu0 0.0
    %186 = vmatpush.msra.mxu0 0.0
    %187 = vmatpush.msra.mxu0 0.0
    %188 = vmatpush.msra.mxu0 0.0
    %189 = vmatpush.msra.mxu0 0.0
    %190 = vmatpush.msra.mxu0 0.0
    %191 = vmatpush.msra.mxu0 0.0
    %192 = vmatpush.msra.mxu0 0.0
    %193 = vmatpush.msra.mxu0 0.0
    %194 = vmatpush.msra.mxu0 0.0
    %195 = vmatpush.msra.mxu0 0.0
    %196 = vmatpush.msra.mxu0 0.0
    %197 = vmatpush.msra.mxu0 0.0
    %198 = vmatpush.msra.mxu0 %v181
    %199 = vmatmul.f32.gmra.mxu0 %v174
    %v200 = vpop.f32.mrf.mxu0
    %v201 = vadd.f32 0.0, %v200
    %202 = vmatmul.f32.gmra.mxu0 %v177
    %v203 = vpop.f32.mrf.mxu0
    %v204 = vadd.f32 0.0, %v203
    %205 = vdwg.mxu0
    %v207 = vperm.slane %v165, 0
    %vm209 = vcmask 130048
    %v211 = vsel %vm209, %v162, 0
    %v214 = vsel %vm209, %v163, 0
    %216 = vmatpush.msra.mxu0 0.0
    %217 = vmatpush.msra.mxu0 0.0
    %218 = vmatpush.msra.mxu0 0.0
    %219 = vmatpush.msra.mxu0 0.0
    %220 = vmatpush.msra.mxu0 0.0
    %221 = vmatpush.msra.mxu0 0.0
    %222 = vmatpush.msra.mxu0 0.0
    %223 = vmatpush.msra.mxu0 0.0
    %224 = vmatpush.msra.mxu0 0.0
    %225 = vmatpush.msra.mxu0 0.0
    %226 = vmatpush.msra.mxu0 0.0
    %227 = vmatpush.msra.mxu0 0.0
    %228 = vmatpush.msra.mxu0 0.0
    %229 = vmatpush.msra.mxu0 0.0
    %230 = vmatpush.msra.mxu0 %v204
    %231 = vmatpush.msra.mxu0 %v201
    %232 = vmatmul.f32.gmra.mxu0 %v211
    %v233 = vpop.f32.mrf.mxu0
    %v234 = vadd.f32 %v207, %v233
    %235 = vmatmul.f32.gmra.mxu0 %v214
    %v236 = vpop.f32.mrf.mxu0
    %v237 = vadd.f32 %v207, %v236
    %238 = vdwg.mxu0
    %v239 = vmax.f32 %v234, 0.0
    %v240 = vmax.f32 %v237, 0.0
    %241 = vmatpush.msra.mxu0 0.0
    %242 = vmatpush.msra.mxu0 0.0
    %243 = vmatpush.msra.mxu0 0.0
    %244 = vmatpush.msra.mxu0 0.0
    %245 = vmatpush.msra.mxu0 0.0
    %246 = vmatpush.msra.mxu0 0.0
    %247 = vmatpush.msra.mxu0 0.0
    %248 = vmatpush.msra.mxu0 0.0
    %249 = vmatpush.msra.mxu0 0.0
    %250 = vmatpush.msra.mxu0 0.0
    %251 = vmatpush.msra.mxu0 0.0
    %252 = vmatpush.msra.mxu0 0.0
    %253 = vmatpush.msra.mxu0 0.0
    %254 = vmatpush.msra.mxu0 0.0
    %255 = vmatpush.msra.mxu0 %v240
    %256 = vmatpush.msra.mxu0 %v239
    %257 = vmatmul.f32.gmra.mxu0 %v211
    %v258 = vpop.f32.mrf.mxu0
    %v259 = vadd.f32 0.0, %v258
    %260 = vmatmul.f32.gmra.mxu0 %v214
    %v261 = vpop.f32.mrf.mxu0
    %v262 = vadd.f32 0.0, %v261
    %263 = vdwg.mxu0
    %v265 = vperm.slane %v166, 0
    %v267 = vmul.f32 %v259, %v265
    %v268 = vmul.f32 %v262, %v265
    %269 = vadd.xlane.f32.xlu0 %v267
    %v270 = vpop.xlane.xlu0 %269
    %271 = vadd.xlane.f32.xlu0 %v268
    %v272 = vpop.xlane.xlu0 %271
    %v273 = vstv %s167
    %v274 = vadd.f32 %v270, %v273
    %v275 = vadd.f32 %v272, %v273
    %v276 = vmax.f32 %v274, 0.0
    %v277 = vmax.f32 %v275, 0.0
    %v278 = vmul.f32 %v276, %v168
    %v279 = vmul.f32 %v277, %v169
    %v280 = vadd.f32 %v278, %v279
    %v281 = vrot.slane %v280, 4
    %v282 = vadd.f32 %v280, %v281
    %v283 = vrot.slane %v282, 2
    %v284 = vadd.f32 %v282, %v283
    %v285 = vrot.slane %v284, 1
    %v286 = vadd.f32 %v284, %v285
    %s287 = scalar_lea.vmem %s0, 16
    %v288 = vld [vmem:[%s287] sm:$0xff]
    %v289 = vld [vmem:[%s287 + $0x8] sm:$0xff]
    %v291 = vsel %vm172, %v288, 0
    %v294 = vsel %vm172, %v289, 0
    %296 = vmatpush.msra.mxu0 0.0
    %297 = vmatpush.msra.mxu0 0.0
    %298 = vmatpush.msra.mxu0 0.0
    %299 = vmatpush.msra.mxu0 0.0
    %300 = vmatpush.msra.mxu0 0.0
    %301 = vmatpush.msra.mxu0 0.0
    %302 = vmatpush.msra.mxu0 0.0
    %303 = vmatpush.msra.mxu0 0.0
    %304 = vmatpush.msra.mxu0 0.0
    %305 = vmatpush.msra.mxu0 0.0
    %306 = vmatpush.msra.mxu0 0.0
    %307 = vmatpush.msra.mxu0 0.0
    %308 = vmatpush.msra.mxu0 0.0
    %309 = vmatpush.msra.mxu0 0.0
    %310 = vmatpush.msra.mxu0 0.0
    %311 = vmatpush.msra.mxu0 %v181
    %312 = vmatmul.f32.gmra.mxu0 %v291
    %v313 = vpop.f32.mrf.mxu0
    %v314 = vadd.f32 0.0, %v313
    %315 = vmatmul.f32.gmra.mxu0 %v294
    %v316 = vpop.f32.mrf.mxu0
    %v317 = vadd.f32 0.0, %v316
    %318 = vdwg.mxu0
    %319 = vmatpush.msra.mxu0 0.0
    %320 = vmatpush.msra.mxu0 0.0
    %321 = vmatpush.msra.mxu0 0.0
    %322 = vmatpush.msra.mxu0 0.0
    %323 = vmatpush.msra.mxu0 0.0
    %324 = vmatpush.msra.mxu0 0.0
    %325 = vmatpush.msra.mxu0 0.0
    %326 = vmatpush.msra.mxu0 0.0
    %327 = vmatpush.msra.mxu0 0.0
    %328 = vmatpush.msra.mxu0 0.0
    %329 = vmatpush.msra.mxu0 0.0
    %330 = vmatpush.msra.mxu0 0.0
    %331 = vmatpush.msra.mxu0 0.0
    %332 = vmatpush.msra.mxu0 0.0
    %333 = vmatpush.msra.mxu0 %v317
    %334 = vmatpush.msra.mxu0 %v314
    %335 = vmatmul.f32.gmra.mxu0 %v211
    %v336 = vpop.f32.mrf.mxu0
    %v337 = vadd.f32 %v207, %v336
    %338 = vmatmul.f32.gmra.mxu0 %v214
    %v339 = vpop.f32.mrf.mxu0
    %v340 = vadd.f32 %v207, %v339
    %341 = vdwg.mxu0
    %v342 = vmax.f32 %v337, 0.0
    %v343 = vmax.f32 %v340, 0.0
    %344 = vmatpush.msra.mxu0 0.0
    %345 = vmatpush.msra.mxu0 0.0
    %346 = vmatpush.msra.mxu0 0.0
    %347 = vmatpush.msra.mxu0 0.0
    %348 = vmatpush.msra.mxu0 0.0
    %349 = vmatpush.msra.mxu0 0.0
    %350 = vmatpush.msra.mxu0 0.0
    %351 = vmatpush.msra.mxu0 0.0
    %352 = vmatpush.msra.mxu0 0.0
    %353 = vmatpush.msra.mxu0 0.0
    %354 = vmatpush.msra.mxu0 0.0
    %355 = vmatpush.msra.mxu0 0.0
    %356 = vmatpush.msra.mxu0 0.0
    %357 = vmatpush.msra.mxu0 0.0
    %358 = vmatpush.msra.mxu0 %v343
    %359 = vmatpush.msra.mxu0 %v342
    %360 = vmatmul.f32.gmra.mxu0 %v211
    %v361 = vpop.f32.mrf.mxu0
    %v362 = vadd.f32 0.0, %v361
    %363 = vmatmul.f32.gmra.mxu0 %v214
    %v364 = vpop.f32.mrf.mxu0
    %v365 = vadd.f32 0.0, %v364
    %366 = vdwg.mxu0
    %v367 = vmul.f32 %v362, %v265
    %v368 = vmul.f32 %v365, %v265
    %369 = vadd.xlane.f32.xlu0 %v367
    %v370 = vpop.xlane.xlu0 %369
    %371 = vadd.xlane.f32.xlu0 %v368
    %v372 = vpop.xlane.xlu0 %371
    %v373 = vadd.f32 %v370, %v273
    %v374 = vadd.f32 %v372, %v273
    %v375 = vmax.f32 %v373, 0.0
    %v376 = vmax.f32 %v374, 0.0
    %v377 = vmul.f32 %v375, %v168
    %v378 = vmul.f32 %v376, %v169
    %v379 = vadd.f32 %v377, %v378
    %v380 = vrot.slane %v379, 4
    %v381 = vadd.f32 %v379, %v380
    %v382 = vrot.slane %v381, 2
    %v383 = vadd.f32 %v381, %v382
    %v384 = vrot.slane %v383, 1
    %v385 = vadd.f32 %v383, %v384
    %vm386 = vcmask 1040384
    %v387 = vsel %vm386, %v286, %v385
    %v388 = vld [vmem:[%s7] sm:$0xff]
    %v389 = vld [vmem:[%s7 + $0x8] sm:$0xff]
    %v390 = vld [vmem:[%s7 + $0x10] sm:$0xff]
    %v391 = vld [vmem:[%s7 + $0x18] sm:$0xff]
    %v392 = vld [vmem:[#allocation11] sm:$0x1]
    %vm393 = vcmask 261120
    %v395 = vsel %vm393, 0.0, 0
    %397 = vmatpush.msra.mxu0 0.0
    %398 = vmatpush.msra.mxu0 0.0
    %399 = vmatpush.msra.mxu0 0.0
    %400 = vmatpush.msra.mxu0 0.0
    %401 = vmatpush.msra.mxu0 0.0
    %402 = vmatpush.msra.mxu0 0.0
    %403 = vmatpush.msra.mxu0 0.0
    %404 = vmatpush.msra.mxu0 0.0
    %405 = vmatpush.msra.mxu0 0.0
    %406 = vmatpush.msra.mxu0 0.0
    %407 = vmatpush.msra.mxu0 0.0
    %408 = vmatpush.msra.mxu0 0.0
    %409 = vmatpush.msra.mxu0 %v391
    %410 = vmatpush.msra.mxu0 %v390
    %411 = vmatpush.msra.mxu0 %v389
    %412 = vmatpush.msra.mxu0 %v388
    %413 = vmatmul.f32.gmra.mxu0 %v395
    %v414 = vpop.f32.mrf.mxu0
    %v415 = vadd.f32 0.0, %v414
    %416 = vdwg.mxu0
    %v417 = vadd.f32 %v387, %v415
    %v419 = vperm.slane %v392, 0
    %v421 = vadd.f32 %v417, %v419
    %v422 = vxor.u32 %v421, 2147483648
    %v423 = vmul.f32 %v422, 1.442695
    %v424 = vpow.pop %v423
    %v425 = vadd.f32 %v424, 1.0
    %v426 = vrcp.pop %v425
    %v427 = vmul.f32 %v425, %v426
    %v428 = vsub.f32 1.0, %v427
    %v429 = vmul.f32 %v426, %v428
    %v430 = vadd.f32 %v426, %v429
    %vm431 = vweird.f32 %v425
    %vm432 = vweird.f32 %v426
    %vm433 = vmor %vm431, %vm432
    %v434 = vsel %vm433, %v426, %v430
    %v435 = vand.u32 2147483647, %v425
    %vm436 = vcmp.eq.f32.partialorder %v435, 8.507059e+37
    %v437 = vand.u32 %v425, 2147483648
    %v438 = vor.u32 1.1754944e-38, %v437
    %v439 = vsel %vm436, %v438, %v434
    %v440 = vmul.f32 1.0, %v439
    %v441 = vtanh.pop %v421
    %v442 = vmul.f32 %v440, 0.0
    %444 = vrot.lane.b32.xlu0 %v441, 64
    %v445 = vpop.permute.xlu0 %444
    %v447 = vmul.f32 %v440, %v445
    %449 = vrot.lane.b32.xlu0 %v447, 32
    %v450 = vpop.permute.xlu0 %449
    %v452 = vadd.f32 %v442, %v450
    %v453 = vtanh.pop %v452
    %455 = vrot.lane.b32.xlu0 %v453, 64
    %v456 = vpop.permute.xlu0 %455
    %v458 = vmul.f32 %v440, %v456
    %v459 = vld [vmem:[#allocation12] sm:$0xff]
    %v460 = vld [vmem:[#allocation12 + $0x8] sm:$0xff]
    %v461 = vld [vmem:[#allocation12 + $0x10] sm:$0xff]
    %v462 = vld [vmem:[#allocation12 + $0x18] sm:$0xff]
    %v463 = vld [vmem:[#allocation14] sm:$0xff]
    %v464 = vld [vmem:[#allocation14 + $0x8] sm:$0xff]
    %v465 = vld [vmem:[#allocation14 + $0x10] sm:$0xff]
    %v466 = vld [vmem:[#allocation14 + $0x18] sm:$0xff]
    %v467 = vld [vmem:[#allocation15] sm:$0x1]
    %468 = vmatpush.msra.mxu0 0.0
    %469 = vmatpush.msra.mxu0 0.0
    %470 = vmatpush.msra.mxu0 0.0
    %471 = vmatpush.msra.mxu0 0.0
    %472 = vmatpush.msra.mxu0 0.0
    %473 = vmatpush.msra.mxu0 0.0
    %474 = vmatpush.msra.mxu0 0.0
    %475 = vmatpush.msra.mxu0 0.0
    %476 = vmatpush.msra.mxu0 0.0
    %477 = vmatpush.msra.mxu0 0.0
    %478 = vmatpush.msra.mxu0 0.0
    %479 = vmatpush.msra.mxu0 0.0
    %480 = vmatpush.msra.mxu0 %v466
    %481 = vmatpush.msra.mxu0 %v465
    %482 = vmatpush.msra.mxu0 %v464
    %483 = vmatpush.msra.mxu0 %v463
    %484 = vmatmul.f32.gmra.mxu0 %v395
    %v485 = vpop.f32.mrf.mxu0
    %v486 = vadd.f32 0.0, %v485
    %487 = vdwg.mxu0
    %489 = vrot.lane.b32.xlu0 %v458, 32
    %v490 = vpop.permute.xlu0 %489
    %v491 = vsel %vm393, %v490, 0
    %493 = vmatpush.msra.mxu0 0.0
    %494 = vmatpush.msra.mxu0 0.0
    %495 = vmatpush.msra.mxu0 0.0
    %496 = vmatpush.msra.mxu0 0.0
    %497 = vmatpush.msra.mxu0 0.0
    %498 = vmatpush.msra.mxu0 0.0
    %499 = vmatpush.msra.mxu0 0.0
    %500 = vmatpush.msra.mxu0 0.0
    %501 = vmatpush.msra.mxu0 0.0
    %502 = vmatpush.msra.mxu0 0.0
    %503 = vmatpush.msra.mxu0 0.0
    %504 = vmatpush.msra.mxu0 0.0
    %505 = vmatpush.msra.mxu0 %v462
    %506 = vmatpush.msra.mxu0 %v461
    %507 = vmatpush.msra.mxu0 %v460
    %508 = vmatpush.msra.mxu0 %v459
    %509 = vmatmul.f32.gmra.mxu0 %v491
    %v510 = vpop.f32.mrf.mxu0
    %v511 = vadd.f32 %v486, %v510
    %512 = vdwg.mxu0
    %v514 = vperm.slane %v467, 0
    %v516 = vadd.f32 %v511, %v514
    %v517 = vxor.u32 %v516, 2147483648
    %v518 = vmul.f32 %v517, 1.442695
    %v519 = vpow.pop %v518
    %v520 = vadd.f32 %v519, 1.0
    %v521 = vrcp.pop %v520
    %v522 = vmul.f32 %v520, %v521
    %v523 = vsub.f32 1.0, %v522
    %v524 = vmul.f32 %v521, %v523
    %v525 = vadd.f32 %v521, %v524
    %vm526 = vweird.f32 %v520
    %vm527 = vweird.f32 %v521
    %vm528 = vmor %vm526, %vm527
    %v529 = vsel %vm528, %v521, %v525
    %v530 = vand.u32 2147483647, %v520
    %vm531 = vcmp.eq.f32.partialorder %v530, 8.507059e+37
    %v532 = vand.u32 %v520, 2147483648
    %v533 = vor.u32 1.1754944e-38, %v532
    %v534 = vsel %vm531, %v533, %v529
    %v535 = vmul.f32 1.0, %v534
    %v536 = vtanh.pop %v516
    %v537 = vmul.f32 %v535, 0.0
    %539 = vrot.lane.b32.xlu0 %v536, 64
    %v540 = vpop.permute.xlu0 %539
    %v542 = vmul.f32 %v535, %v540
    %544 = vrot.lane.b32.xlu0 %v542, 32
    %v545 = vpop.permute.xlu0 %544
    %v547 = vadd.f32 %v537, %v545
    %v548 = vtanh.pop %v547
    %550 = vrot.lane.b32.xlu0 %v548, 64
    %v551 = vpop.permute.xlu0 %550
    %v553 = vmul.f32 %v535, %v551
    %555 = vrot.lane.b32.xlu0 %v553, 32
    %v556 = vpop.permute.xlu0 %555
    %vm558 = vcmask 254976
    %559 = vst.msk [vmem:[#allocation17] sm:$0x3] %vm558, %v556
    %561 = vst.msk [vmem:[#allocation18] sm:$0x3] %vm558, %v490
    %s562 = scalar_lea.vmem [#allocation18], 2
    %563 = vst.msk [vmem:[%s562] sm:$0x3] %vm558, %v556
    %565 = vrot.lane.b32.xlu0 %v452, 96
    %v566 = vpop.permute.xlu0 %565
    %568 = vst.msk [vmem:[#allocation20] sm:$0x3] %vm558, %v566
    %570 = vrot.lane.b32.xlu0 %v547, 96
    %v571 = vpop.permute.xlu0 %570
    %s573 = scalar_lea.vmem [#allocation20], 2
    %574 = vst.msk [vmem:[%s573] sm:$0x3] %vm558, %v571
    // Predicated region
    $region82: #{encoder_forward.1} parent=1 // pred_check
      _
    $region83: #{encoder_forward.1} parent=1 // pred_check_branch
      %576 = sbr.rel (0) target = $region85
    $region84: #{encoder_forward.1} parent=1 // pred_region
      %578 = vsyncadd [#allocation5], 0
      %s580 = sshll.u32 [#allocation17], 4
      %s581 = int_to_ptr.vmem [resolvable:$true] %s580
      %s582 = sshll.u32 %s12, 4
      %s583 = int_to_ptr.hbm [resolvable:$true] %s582
      %585 = dma.vmem_to_hbm [thread:$0]  %s581, 32, %s583, [#allocation5]
    $region85: #{encoder_forward.1} parent=1 // pred_fallthru
      _
    // Predicated region
    $region86: #{encoder_forward.1} parent=1 // pred_check
      _
    $region87: #{encoder_forward.1} parent=1 // pred_check_branch
      %587 = sbr.rel (0) target = $region89
    $region88: #{encoder_forward.1} parent=1 // pred_region
      %589 = vsyncadd [#allocation19], 0
      %s590 = sshll.u32 [#allocation18], 4
      %s591 = int_to_ptr.vmem [resolvable:$true] %s590
      %s592 = sshll.u32 %s13, 4
      %s593 = int_to_ptr.hbm [resolvable:$true] %s592
      %598 = dma.vmem_to_hbm [thread:$0]  %s591, 64, %s593, [#allocation19], 32, 32, 2
    $region89: #{encoder_forward.1} parent=1 // pred_fallthru
      _
    // Predicated region
    $region90: #{encoder_forward.1} parent=1 // pred_check
      _
    $region91: #{encoder_forward.1} parent=1 // pred_check_branch
      %600 = sbr.rel (0) target = $region93
    $region92: #{encoder_forward.1} parent=1 // pred_region
      %602 = vsyncadd [#allocation19], 0
      %s603 = sshll.u32 [#allocation20], 4
      %s604 = int_to_ptr.vmem [resolvable:$true] %s603
      %s605 = sshll.u32 %s14, 4
      %s606 = int_to_ptr.hbm [resolvable:$true] %s605
      %611 = dma.vmem_to_hbm [thread:$0]  %s604, 64, %s606, [#allocation19], 32, 32, 2
    $region93: #{encoder_forward.1} parent=1 // pred_fallthru
      _
    // Predicated region
    $region94: #{encoder_forward.1} parent=1 // pred_check
      _
    $region95: #{encoder_forward.1} parent=1 // pred_check_branch
      %613 = sbr.rel (0) target = $region97
    $region96: #{encoder_forward.1} parent=1 // pred_region
      %615 = dma.done [#allocation5], 32
    $region97: #{encoder_forward.1} parent=1 // pred_fallthru
      _
    // Predicated region
    $region98: #{encoder_forward.1} parent=1 // pred_check
      _
    $region99: #{encoder_forward.1} parent=1 // pred_check_branch
      %617 = sbr.rel (0) target = $region101
    $region100: #{encoder_forward.1} parent=1 // pred_region
      %619 = dma.done [#allocation19], 64
    $region101: #{encoder_forward.1} parent=1 // pred_fallthru
      _
    // Predicated region
    $region102: #{encoder_forward.1} parent=1 // pred_check
      _
    $region103: #{encoder_forward.1} parent=1 // pred_check_branch
      %621 = sbr.rel (0) target = $region105
    $region104: #{encoder_forward.1} parent=1 // pred_region
      %623 = dma.done [#allocation19], 64
    $region105: #{encoder_forward.1} parent=1 // pred_fallthru
      _
    %624 = vsyncpa [#allocation4], 1
    %625 = vsyncpa [#allocation7], 1
    %626 = vsyncpa [#allocation10], 1
    %627 = vsyncpa [#allocation13], 1
    %628 = vsyncpa [#allocation16], 1
    %629 = vsyncpa [#allocation5], 1
    %630 = vsyncpa [#allocation19], 1

</llo_original>
